<compile_context>
chip_gen: v7x
topology: tpu7x:2x2x1
jax: 0.10.0
libtpu: 0.0.40
codegen_flags: <defaults>
</compile_context>

<pallas_src>
import jax
import jax.numpy as jnp
from jax.experimental import pallas as pl
from jax.experimental.pallas import tpu as pltpu


def mlp_kernel(x_ref, w1_ref, b1_ref, w2_ref, b2_ref, w3_ref, b3_ref, o_ref):
    # x_ref: (8, TB)  -- batch on the lane axis.
    x = x_ref[...].astype(jnp.float32)

    # (6, 8) @ (8, TB) -> (6, TB)
    h1 = jnp.dot(w1_ref[...], x, preferred_element_type=jnp.float32) + b1_ref[...]
    h1 = jax.nn.sigmoid(h1)

    # (4, 6) @ (6, TB) -> (4, TB)
    h2 = jnp.dot(w2_ref[...], h1, preferred_element_type=jnp.float32) + b2_ref[...]
    h2 = jax.nn.sigmoid(h2)

    # (1, 4) @ (4, TB) -> (1, TB)   (lane-dense output row)
    h3 = jnp.dot(w3_ref[...], h2, preferred_element_type=jnp.float32) + b3_ref[...]
    h3 = jax.nn.sigmoid(h3)

    o_ref[...] = h3.astype(o_ref.dtype)


def mlp_forward(x, params, tb=512):
    """x: (B, 8) batch-major (PyTorch nn.Linear convention). Returns (B, 1)."""
    w1, b1, w2, b2, w3, b3 = params  # weights (out, in), biases (out, 1)
    B = x.shape[0]
    assert tb % 128 == 0, "batch tile must be a multiple of the 128-lane width"

    # Pad batch up to a multiple of the lane tile, transpose to (8, Bp).
    n_tiles = pl.cdiv(B, tb)
    Bp = n_tiles * tb
    xt = jnp.zeros((8, Bp), x.dtype).at[:, :B].set(x.T)

    resident = lambda shape: pl.BlockSpec(shape, lambda i: (0, 0))

    out_t = pl.pallas_call(
        mlp_kernel,
        out_shape=jax.ShapeDtypeStruct((1, Bp), jnp.float32),
        grid_spec=pltpu.PrefetchScalarGridSpec(
            num_scalar_prefetch=0,
            grid=(n_tiles,),
            in_specs=[
                pl.BlockSpec((8, tb), lambda i: (0, i)),   # x tile, double-buffered
                resident(w1.shape), resident(b1.shape),
                resident(w2.shape), resident(b2.shape),
                resident(w3.shape), resident(b3.shape),
            ],
            out_specs=pl.BlockSpec((1, tb), lambda i: (0, i)),
        ),
        compiler_params=pltpu.CompilerParams(
            dimension_semantics=("parallel",),
        ),
    )(xt, w1, b1, w2, b2, w3, b3)

    return out_t[:, :B].T  # (B, 1)


def init_params(key):
    # PyTorch-style uniform init with bound 1/sqrt(fan_in).
    # Weights stored (out, in); biases stored (out, 1) for the transposed layout.
    def linear(key, fan_in, fan_out):
        kw, kb = jax.random.split(key)
        bound = 1.0 / jnp.sqrt(fan_in)
        w = jax.random.uniform(kw, (fan_out, fan_in), jnp.float32, -bound, bound)
        b = jax.random.uniform(kb, (fan_out, 1), jnp.float32, -bound, bound)
        return w, b

    k1, k2, k3 = jax.random.split(key, 3)
    w1, b1 = linear(k1, 8, 6)
    w2, b2 = linear(k2, 6, 4)
    w3, b3 = linear(k3, 4, 1)
    return (w1, b1, w2, b2, w3, b3)


def reference_forward(x, params):
    w1, b1, w2, b2, w3, b3 = params
    h = jax.nn.sigmoid(x @ w1.T + b1.T)
    h = jax.nn.sigmoid(h @ w2.T + b2.T)
    return jax.nn.sigmoid(h @ w3.T + b3.T)


if __name__ == "__main__":
    key = jax.random.PRNGKey(0)
    kx, kx2, kp = jax.random.split(key, 3)
    params = init_params(kp)

    # Small batch (exercises the tail-padding path: 8 < tile).
    B = 8
    x = jax.random.normal(kx, (B, 8), jnp.float32)
    out = jax.block_until_ready(mlp_forward(x, params))
    ref = reference_forward(x, params)
    assert out.shape == (B, 1)
    assert jnp.allclose(out, ref, atol=1e-5, rtol=1e-5)

    # Multi-tile batch with a ragged tail (exercises grid > 1 + padding).
    B2 = 700
    x2 = jax.random.normal(kx2, (B2, 8), jnp.float32)
    out2 = jax.block_until_ready(mlp_forward(x2, params))
    ref2 = reference_forward(x2, params)
    assert out2.shape == (B2, 1)
    assert jnp.allclose(out2, ref2, atol=1e-5, rtol=1e-5)

    print("KERNEL_OK")
</pallas_src>

<mosaic_0001>
module attributes {stable_mosaic.version = 11 : i64} {
  func.func @mlp_kernel(%arg0: i32, %arg1: memref<8x512xf32, #tpu.memory_space<vmem>>, %arg2: memref<6x8xf32, #tpu.memory_space<vmem>>, %arg3: memref<6x1xf32, #tpu.memory_space<vmem>>, %arg4: memref<4x6xf32, #tpu.memory_space<vmem>>, %arg5: memref<4x1xf32, #tpu.memory_space<vmem>>, %arg6: memref<1x4xf32, #tpu.memory_space<vmem>>, %arg7: memref<1x1xf32, #tpu.memory_space<vmem>>, %arg8: memref<1x512xf32, #tpu.memory_space<vmem>>) attributes {dimension_semantics = [#tpu.dimension_semantics<parallel>], iteration_bounds = array<i64: 1>, scalar_prefetch = 0 : i64, scratch_operands = 0 : i64, tpu.core_type = #tpu.core_type<tc>, window_params = [{transform_indices = @transform_0, window_bounds = array<i64: 8, 512>}, {pipeline_mode = #tpu.pipeline_mode<synchronous>, transform_indices = @transform_1, window_bounds = array<i64: 6, 8>}, {pipeline_mode = #tpu.pipeline_mode<synchronous>, transform_indices = @transform_2, window_bounds = array<i64: 6, 1>}, {pipeline_mode = #tpu.pipeline_mode<synchronous>, transform_indices = @transform_3, window_bounds = array<i64: 4, 6>}, {pipeline_mode = #tpu.pipeline_mode<synchronous>, transform_indices = @transform_4, window_bounds = array<i64: 4, 1>}, {pipeline_mode = #tpu.pipeline_mode<synchronous>, transform_indices = @transform_5, window_bounds = array<i64: 1, 4>}, {pipeline_mode = #tpu.pipeline_mode<synchronous>, transform_indices = @transform_6, window_bounds = array<i64: 1, 1>}, {transform_indices = @transform_7, window_bounds = array<i64: 1, 512>}]} {
    %c0 = arith.constant 0 : index
    %c0_0 = arith.constant 0 : index
    %0 = vector.load %arg1[%c0, %c0_0] : memref<8x512xf32, #tpu.memory_space<vmem>>, vector<8x512xf32>
    %c0_1 = arith.constant 0 : index
    %c0_2 = arith.constant 0 : index
    %1 = vector.load %arg2[%c0_1, %c0_2] : memref<6x8xf32, #tpu.memory_space<vmem>>, vector<6x8xf32>
    %cst = arith.constant dense<0.000000e+00> : vector<6x512xf32>
    %2 = tpu.matmul %1, %0, %cst {dimension_numbers = #tpu.dot_dimension_numbers<[1], [0], [0], [1], [0, 0, 1, 1], [], []>} : vector<6x8xf32>, vector<8x512xf32>, vector<6x512xf32> -> vector<6x512xf32>
    %c0_3 = arith.constant 0 : index
    %c0_4 = arith.constant 0 : index
    %3 = vector.load %arg3[%c0_3, %c0_4] : memref<6x1xf32, #tpu.memory_space<vmem>>, vector<6x1xf32>
    %4 = vector.broadcast %3 : vector<6x1xf32> to vector<6x512xf32>
    %5 = arith.addf %2, %4 : vector<6x512xf32>
    %6 = arith.negf %5 : vector<6x512xf32>
    %7 = math.exp %6 : vector<6x512xf32>
    %cst_5 = arith.constant 1.000000e+00 : f32
    %8 = vector.broadcast %cst_5 : f32 to vector<6x512xf32>
    %9 = arith.addf %8, %7 : vector<6x512xf32>
    %10 = arith.divf %8, %9 : vector<6x512xf32>
    %c0_6 = arith.constant 0 : index
    %c0_7 = arith.constant 0 : index
    %11 = vector.load %arg4[%c0_6, %c0_7] : memref<4x6xf32, #tpu.memory_space<vmem>>, vector<4x6xf32>
    %cst_8 = arith.constant dense<0.000000e+00> : vector<4x512xf32>
    %12 = tpu.matmul %11, %10, %cst_8 {dimension_numbers = #tpu.dot_dimension_numbers<[1], [0], [0], [1], [0, 0, 1, 1], [], []>} : vector<4x6xf32>, vector<6x512xf32>, vector<4x512xf32> -> vector<4x512xf32>
    %c0_9 = arith.constant 0 : index
    %c0_10 = arith.constant 0 : index
    %13 = vector.load %arg5[%c0_9, %c0_10] : memref<4x1xf32, #tpu.memory_space<vmem>>, vector<4x1xf32>
    %14 = vector.broadcast %13 : vector<4x1xf32> to vector<4x512xf32>
    %15 = arith.addf %12, %14 : vector<4x512xf32>
    %16 = arith.negf %15 : vector<4x512xf32>
    %17 = math.exp %16 : vector<4x512xf32>
    %cst_11 = arith.constant 1.000000e+00 : f32
    %18 = vector.broadcast %cst_11 : f32 to vector<4x512xf32>
    %19 = arith.addf %18, %17 : vector<4x512xf32>
    %20 = arith.divf %18, %19 : vector<4x512xf32>
    %c0_12 = arith.constant 0 : index
    %c0_13 = arith.constant 0 : index
    %21 = vector.load %arg6[%c0_12, %c0_13] : memref<1x4xf32, #tpu.memory_space<vmem>>, vector<1x4xf32>
    %cst_14 = arith.constant dense<0.000000e+00> : vector<1x512xf32>
    %22 = tpu.matmul %21, %20, %cst_14 {dimension_numbers = #tpu.dot_dimension_numbers<[1], [0], [0], [1], [0, 0, 1, 1], [], []>} : vector<1x4xf32>, vector<4x512xf32>, vector<1x512xf32> -> vector<1x512xf32>
    %c0_15 = arith.constant 0 : index
    %c0_16 = arith.constant 0 : index
    %23 = vector.load %arg7[%c0_15, %c0_16] : memref<1x1xf32, #tpu.memory_space<vmem>>, vector<1x1xf32>
    %24 = vector.broadcast %23 : vector<1x1xf32> to vector<1x512xf32>
    %25 = arith.addf %22, %24 : vector<1x512xf32>
    %26 = arith.negf %25 : vector<1x512xf32>
    %27 = math.exp %26 : vector<1x512xf32>
    %cst_17 = arith.constant 1.000000e+00 : f32
    %28 = vector.broadcast %cst_17 : f32 to vector<1x512xf32>
    %29 = arith.addf %28, %27 : vector<1x512xf32>
    %30 = arith.divf %28, %29 : vector<1x512xf32>
    %c0_18 = arith.constant 0 : index
    %c0_19 = arith.constant 0 : index
    %31 = vector.load %arg8[%c0_18, %c0_19] : memref<1x512xf32, #tpu.memory_space<vmem>>, vector<1x512xf32>
    tpu.vector_store %arg8[%c0_18, %c0_19], %30 {strides = array<i32>} : memref<1x512xf32, #tpu.memory_space<vmem>>, vector<1x512xf32>,
    return
  }
  func.func @transform_0(%arg0: i32) -> (i32, i32) {
    %c0_i32 = arith.constant 0 : i32
    %c0_i32_0 = arith.constant 0 : i32
    return %c0_i32, %arg0 : i32, i32
  }
  func.func @transform_1(%arg0: i32) -> (i32, i32) {
    %c0_i32 = arith.constant 0 : i32
    %c0_i32_0 = arith.constant 0 : i32
    %c0_i32_1 = arith.constant 0 : i32
    return %c0_i32, %c0_i32_0 : i32, i32
  }
  func.func @transform_2(%arg0: i32) -> (i32, i32) {
    %c0_i32 = arith.constant 0 : i32
    %c0_i32_0 = arith.constant 0 : i32
    %c0_i32_1 = arith.constant 0 : i32
    return %c0_i32, %c0_i32_0 : i32, i32
  }
  func.func @transform_3(%arg0: i32) -> (i32, i32) {
    %c0_i32 = arith.constant 0 : i32
    %c0_i32_0 = arith.constant 0 : i32
    %c0_i32_1 = arith.constant 0 : i32
    return %c0_i32, %c0_i32_0 : i32, i32
  }
  func.func @transform_4(%arg0: i32) -> (i32, i32) {
    %c0_i32 = arith.constant 0 : i32
    %c0_i32_0 = arith.constant 0 : i32
    %c0_i32_1 = arith.constant 0 : i32
    return %c0_i32, %c0_i32_0 : i32, i32
  }
  func.func @transform_5(%arg0: i32) -> (i32, i32) {
    %c0_i32 = arith.constant 0 : i32
    %c0_i32_0 = arith.constant 0 : i32
    %c0_i32_1 = arith.constant 0 : i32
    return %c0_i32, %c0_i32_0 : i32, i32
  }
  func.func @transform_6(%arg0: i32) -> (i32, i32) {
    %c0_i32 = arith.constant 0 : i32
    %c0_i32_0 = arith.constant 0 : i32
    %c0_i32_1 = arith.constant 0 : i32
    return %c0_i32, %c0_i32_0 : i32, i32
  }
  func.func @transform_7(%arg0: i32) -> (i32, i32) {
    %c0_i32 = arith.constant 0 : i32
    %c0_i32_0 = arith.constant 0 : i32
    return %c0_i32, %arg0 : i32, i32
  }
}

</mosaic_0001>

<llo_original>
// kernel: tpu_custom_call.1
$region0: #{tpu_custom_call.1}
  #allocation0 [shape = 'u32[]', space=smem, size = 0x4, offset = 0x4, fixed_abs, tag = 'smem constant byte address 0x4 - core index']
  #allocation1 [shape = 'u32[144,128]{1,0:T(1,128)}', space=vmem, size = 0x12000, scoped, tag = 'internal scratch']
  #allocation2 [shape = 'f32[1,1]{1,0:T(1,128)S(1)}', space=vmem, size = 0x200, scoped, tag = 'scoped memory for tpu_custom_call.1']
  %s0 = inlined_call_operand.hbm [shape: f32[8,512], index: 0, kind: input, shape index: {}]
  %s1 = inlined_call_operand.vmem [shape: f32[6,8], index: 1, kind: input, shape index: {}]
  %s2 = inlined_call_operand.vmem [shape: f32[6,1], index: 2, kind: input, shape index: {}]
  %s3 = inlined_call_operand.vmem [shape: f32[4,6], index: 3, kind: input, shape index: {}]
  %s4 = inlined_call_operand.vmem [shape: f32[4,1], index: 4, kind: input, shape index: {}]
  %s5 = inlined_call_operand.vmem [shape: f32[1,4], index: 5, kind: input, shape index: {}]
  %s6 = inlined_call_operand.<no memory space> [shape: f32[1,1], index: 6, kind: input, shape index: {}]
  %s7 = inlined_call_operand.hbm [shape: f32[1,512], index: 7, kind: output, shape index: {}]
  %s8 = sld [smem:[#allocation0]]
  $region42: #{tpu_custom_call.1} parent=0
    _
  %s10 = ssub.s32 1, %s8
  %s11 = scalar_select 0, %s10, %s8
  %v12 = vstv %s6
  %13 = vst [vmem:[#allocation2] sm:$0x1] %v12
  $region1: #{tpu_custom_call.1} parent=0
    #allocation3 [shape = 'u8[16384]{0}', space=vmem, size = 0x4000, scoped, tag = 'input window, operand 0, single buffered']
    #allocation4 [shape = 's32[1]{0}', space=sflag, size = 0x4, scoped, tag = 'scoped memory for tpu_custom_call.1']
    #allocation5 [shape = 's32[1]{0}', space=sflag, size = 0x4, scoped, tag = 'scoped memory for tpu_custom_call.1']
    #allocation6 [shape = 'u8[2048]{0}', space=vmem, size = 0x800, scoped, tag = 'output window, operand 0, single buffered']
    %14 = vsyncpa [#allocation4], 0
    %15 = vsyncpa [#allocation5], 0
    // Predicated region
    $region2: #{tpu_custom_call.1} parent=1 // pred_check
      _
    $region3: #{tpu_custom_call.1} parent=1 // pred_check_branch
      %17 = sbr.rel (0) target = $region5
    $region4: #{tpu_custom_call.1} parent=1 // pred_region
      %s19 = ssub.s32 512, 512
      %20 = vsyncadd [#allocation4], %s19
      %s22 = sshll.u32 [#allocation3], 4
      %s23 = int_to_ptr.vmem [resolvable:$true] %s22
      %25 = dma.hbm_to_vmem [thread:$0]  %s0, 512, %s23, [#allocation4]
    $region5: #{tpu_custom_call.1} parent=1 // pred_fallthru
      _
    // Predicated region
    $region6: #{tpu_custom_call.1} parent=1 // pred_check
      _
    $region7: #{tpu_custom_call.1} parent=1 // pred_check_branch
      %27 = sbr.rel (0) target = $region9
    $region8: #{tpu_custom_call.1} parent=1 // pred_region
      _
    $region9: #{tpu_custom_call.1} parent=1 // pred_fallthru
      _
    // Predicated region
    $region10: #{tpu_custom_call.1} parent=1 // pred_check
      _
    $region11: #{tpu_custom_call.1} parent=1 // pred_check_branch
      %29 = sbr.rel (0) target = $region13
    $region12: #{tpu_custom_call.1} parent=1 // pred_region
      _
    $region13: #{tpu_custom_call.1} parent=1 // pred_fallthru
      _
    // Predicated region
    $region14: #{tpu_custom_call.1} parent=1 // pred_check
      _
    $region15: #{tpu_custom_call.1} parent=1 // pred_check_branch
      %31 = sbr.rel (0) target = $region17
    $region16: #{tpu_custom_call.1} parent=1 // pred_region
      _
    $region17: #{tpu_custom_call.1} parent=1 // pred_fallthru
      _
    // Predicated region
    $region18: #{tpu_custom_call.1} parent=1 // pred_check
      _
    $region19: #{tpu_custom_call.1} parent=1 // pred_check_branch
      %33 = sbr.rel (0) target = $region21
    $region20: #{tpu_custom_call.1} parent=1 // pred_region
      _
    $region21: #{tpu_custom_call.1} parent=1 // pred_fallthru
      _
    // Predicated region
    $region22: #{tpu_custom_call.1} parent=1 // pred_check
      _
    $region23: #{tpu_custom_call.1} parent=1 // pred_check_branch
      %35 = sbr.rel (0) target = $region25
    $region24: #{tpu_custom_call.1} parent=1 // pred_region
      _
    $region25: #{tpu_custom_call.1} parent=1 // pred_fallthru
      _
    // Predicated region
    $region26: #{tpu_custom_call.1} parent=1 // pred_check
      _
    $region27: #{tpu_custom_call.1} parent=1 // pred_check_branch
      %37 = sbr.rel (0) target = $region29
    $region28: #{tpu_custom_call.1} parent=1 // pred_region
      _
    $region29: #{tpu_custom_call.1} parent=1 // pred_fallthru
      _
    // Predicated region
    $region30: #{tpu_custom_call.1} parent=1 // pred_check
      _
    $region31: #{tpu_custom_call.1} parent=1 // pred_check_branch
      %39 = sbr.rel (0) target = $region33
    $region32: #{tpu_custom_call.1} parent=1 // pred_region
      %40 = dma.done [#allocation4], 512
    $region33: #{tpu_custom_call.1} parent=1 // pred_fallthru
      _
    %v41 = vld [vmem:[#allocation3] sm:$0xff]
    %v42 = vld [vmem:[#allocation3 + $0x8] sm:$0xff]
    %v43 = vld [vmem:[#allocation3 + $0x10] sm:$0xff]
    %v44 = vld [vmem:[#allocation3 + $0x18] sm:$0xff]
    %v45 = vld [vmem:[%s1] sm:$0x3f]
    %v46 = vld [vmem:[%s2] sm:$0x3f]
    %48 = vset.pattern.permute.xlu0 0
    %49 = vperm.xlu0 %48, %v46
    %v50 = vpop.permute.xlu0 %49
    %vm52 = vcmask 64512
    %v54 = vsel %vm52, %v45, 0
    %56 = vmatprep.subr.mxu0 %v42
    %57 = vmatpush1.msra.mxu0 %v41
    %58 = vmatprep.subr.mxu0 0.0
    %59 = vmatpush1.msra.mxu0 0.0
    %60 = vmatprep.subr.mxu0 0.0
    %61 = vmatpush1.msra.mxu0 0.0
    %62 = vmatprep.subr.mxu0 0.0
    %63 = vmatpush1.msra.mxu0 0.0
    %64 = vmatprep.subr.mxu0 0.0
    %65 = vmatpush1.msra.mxu0 0.0
    %66 = vmatprep.subr.mxu0 0.0
    %67 = vmatpush1.msra.mxu0 0.0
    %68 = vmatprep.subr.mxu0 0.0
    %69 = vmatpush1.msra.mxu0 0.0
    %70 = vmatprep.subr.mxu0 0.0
    %71 = vmatpush1.msra.mxu0 0.0
    %72 = vmatprep.subr.mxu0 0.0
    %73 = vmatpush1.msra.mxu0 0.0
    %74 = vmatprep.subr.mxu0 0.0
    %75 = vmatpush1.msra.mxu0 0.0
    %76 = vmatprep.subr.mxu0 0.0
    %77 = vmatpush1.msra.mxu0 0.0
    %78 = vmatprep.subr.mxu0 0.0
    %79 = vmatpush1.msra.mxu0 0.0
    %80 = vmatprep.subr.mxu0 0.0
    %81 = vmatpush1.msra.mxu0 0.0
    %82 = vmatprep.subr.mxu0 0.0
    %83 = vmatpush1.msra.mxu0 0.0
    %84 = vmatprep.subr.mxu0 0.0
    %85 = vmatpush1.msra.mxu0 0.0
    %86 = vmatprep.subr.mxu0 0.0
    %87 = vmatpush1.msra.mxu0 0.0
    %88 = vmatprep.subr.mxu0 0.0
    %89 = vmatpush1.msra.mxu0 0.0
    %90 = vmatprep.subr.mxu0 0.0
    %91 = vmatpush1.msra.mxu0 0.0
    %92 = vmatprep.subr.mxu0 0.0
    %93 = vmatpush1.msra.mxu0 0.0
    %94 = vmatprep.subr.mxu0 0.0
    %95 = vmatpush1.msra.mxu0 0.0
    %96 = vmatprep.subr.mxu0 0.0
    %97 = vmatpush1.msra.mxu0 0.0
    %98 = vmatprep.subr.mxu0 0.0
    %99 = vmatpush1.msra.mxu0 0.0
    %100 = vmatprep.subr.mxu0 0.0
    %101 = vmatpush1.msra.mxu0 0.0
    %102 = vmatprep.subr.mxu0 0.0
    %103 = vmatpush1.msra.mxu0 0.0
    %104 = vmatprep.subr.mxu0 0.0
    %105 = vmatpush1.msra.mxu0 0.0
    %106 = vmatprep.subr.mxu0 0.0
    %107 = vmatpush1.msra.mxu0 0.0
    %108 = vmatprep.subr.mxu0 0.0
    %109 = vmatpush1.msra.mxu0 0.0
    %110 = vmatprep.subr.mxu0 0.0
    %111 = vmatpush1.msra.mxu0 0.0
    %112 = vmatprep.subr.mxu0 0.0
    %113 = vmatpush1.msra.mxu0 0.0
    %114 = vmatprep.subr.mxu0 0.0
    %115 = vmatpush1.msra.mxu0 0.0
    %116 = vmatprep.subr.mxu0 0.0
    %117 = vmatpush1.msra.mxu0 0.0
    %118 = vmatprep.subr.mxu0 0.0
    %119 = vmatpush1.msra.mxu0 0.0
    %120 = vmatprep.mubr.f32.mxu0 0.0
    %121 = vmatmul.mubr.f32.gmra.mrb[0].mxu0 %v54
    %v122 = vpop.f32.mrb[0].mxu0
    %v123 = vadd.f32 %v50, %v122
    %v124 = vpop.f32.mrb[0].mxu0
    %v125 = vadd.f32 %v50, %v124
    %126 = vdwg.mxu0
    %127 = vmatprep.subr.mxu0 %v44
    %128 = vmatpush1.msra.mxu0 %v43
    %129 = vmatprep.subr.mxu0 0.0
    %130 = vmatpush1.msra.mxu0 0.0
    %131 = vmatprep.subr.mxu0 0.0
    %132 = vmatpush1.msra.mxu0 0.0
    %133 = vmatprep.subr.mxu0 0.0
    %134 = vmatpush1.msra.mxu0 0.0
    %135 = vmatprep.subr.mxu0 0.0
    %136 = vmatpush1.msra.mxu0 0.0
    %137 = vmatprep.subr.mxu0 0.0
    %138 = vmatpush1.msra.mxu0 0.0
    %139 = vmatprep.subr.mxu0 0.0
    %140 = vmatpush1.msra.mxu0 0.0
    %141 = vmatprep.subr.mxu0 0.0
    %142 = vmatpush1.msra.mxu0 0.0
    %143 = vmatprep.subr.mxu0 0.0
    %144 = vmatpush1.msra.mxu0 0.0
    %145 = vmatprep.subr.mxu0 0.0
    %146 = vmatpush1.msra.mxu0 0.0
    %147 = vmatprep.subr.mxu0 0.0
    %148 = vmatpush1.msra.mxu0 0.0
    %149 = vmatprep.subr.mxu0 0.0
    %150 = vmatpush1.msra.mxu0 0.0
    %151 = vmatprep.subr.mxu0 0.0
    %152 = vmatpush1.msra.mxu0 0.0
    %153 = vmatprep.subr.mxu0 0.0
    %154 = vmatpush1.msra.mxu0 0.0
    %155 = vmatprep.subr.mxu0 0.0
    %156 = vmatpush1.msra.mxu0 0.0
    %157 = vmatprep.subr.mxu0 0.0
    %158 = vmatpush1.msra.mxu0 0.0
    %159 = vmatprep.subr.mxu0 0.0
    %160 = vmatpush1.msra.mxu0 0.0
    %161 = vmatprep.subr.mxu0 0.0
    %162 = vmatpush1.msra.mxu0 0.0
    %163 = vmatprep.subr.mxu0 0.0
    %164 = vmatpush1.msra.mxu0 0.0
    %165 = vmatprep.subr.mxu0 0.0
    %166 = vmatpush1.msra.mxu0 0.0
    %167 = vmatprep.subr.mxu0 0.0
    %168 = vmatpush1.msra.mxu0 0.0
    %169 = vmatprep.subr.mxu0 0.0
    %170 = vmatpush1.msra.mxu0 0.0
    %171 = vmatprep.subr.mxu0 0.0
    %172 = vmatpush1.msra.mxu0 0.0
    %173 = vmatprep.subr.mxu0 0.0
    %174 = vmatpush1.msra.mxu0 0.0
    %175 = vmatprep.subr.mxu0 0.0
    %176 = vmatpush1.msra.mxu0 0.0
    %177 = vmatprep.subr.mxu0 0.0
    %178 = vmatpush1.msra.mxu0 0.0
    %179 = vmatprep.subr.mxu0 0.0
    %180 = vmatpush1.msra.mxu0 0.0
    %181 = vmatprep.subr.mxu0 0.0
    %182 = vmatpush1.msra.mxu0 0.0
    %183 = vmatprep.subr.mxu0 0.0
    %184 = vmatpush1.msra.mxu0 0.0
    %185 = vmatprep.subr.mxu0 0.0
    %186 = vmatpush1.msra.mxu0 0.0
    %187 = vmatprep.subr.mxu0 0.0
    %188 = vmatpush1.msra.mxu0 0.0
    %189 = vmatprep.subr.mxu0 0.0
    %190 = vmatpush1.msra.mxu0 0.0
    %191 = vmatprep.mubr.f32.mxu0 0.0
    %192 = vmatmul.mubr.f32.gmra.mrb[0].mxu0 %v54
    %v193 = vpop.f32.mrb[0].mxu0
    %v194 = vadd.f32 %v50, %v193
    %v195 = vpop.f32.mrb[0].mxu0
    %v196 = vadd.f32 %v50, %v195
    %197 = vdwg.mxu0
    %v198 = vxor.u32 %v123, 2147483648
    %v199 = vxor.u32 %v125, 2147483648
    %v200 = vxor.u32 %v194, 2147483648
    %v201 = vxor.u32 %v196, 2147483648
    %v202 = vmul.f32 %v198, 1.442695
    %v203 = vpow.pop %v202
    %v204 = vmul.f32 %v199, 1.442695
    %v205 = vpow.pop %v204
    %v206 = vmul.f32 %v200, 1.442695
    %v207 = vpow.pop %v206
    %v208 = vmul.f32 %v201, 1.442695
    %v209 = vpow.pop %v208
    %v210 = vadd.f32 %v203, 1.0
    %v211 = vadd.f32 %v205, 1.0
    %v212 = vadd.f32 %v207, 1.0
    %v213 = vadd.f32 %v209, 1.0
    %v214 = vrcp.pop %v210
    %v215 = vmul.f32 1.0, %v214
    %v216 = vrcp.pop %v211
    %v217 = vmul.f32 1.0, %v216
    %v218 = vrcp.pop %v212
    %v219 = vmul.f32 1.0, %v218
    %v220 = vrcp.pop %v213
    %v221 = vmul.f32 1.0, %v220
    %v222 = vld [vmem:[%s3] sm:$0xf]
    %v223 = vld [vmem:[%s4] sm:$0xf]
    %225 = vset.pattern.permute.xlu0 0
    %226 = vperm.xlu0 %225, %v223
    %v227 = vpop.permute.xlu0 %226
    %vm229 = vcmask 48128
    %v231 = vsel %vm229, %v222, 0
    %vm233 = vcmask 1045504
    %v235 = vsel %vm233, %v215, 0
    %v238 = vsel %vm233, %v217, 0
    %v241 = vsel %vm233, %v219, 0
    %v244 = vsel %vm233, %v221, 0
    %246 = vmatprep.subr.mxu0 %v238
    %247 = vmatpush1.msra.mxu0 %v235
    %248 = vmatprep.subr.mxu0 0.0
    %249 = vmatpush1.msra.mxu0 0.0
    %250 = vmatprep.subr.mxu0 0.0
    %251 = vmatpush1.msra.mxu0 0.0
    %252 = vmatprep.subr.mxu0 0.0
    %253 = vmatpush1.msra.mxu0 0.0
    %254 = vmatprep.subr.mxu0 0.0
    %255 = vmatpush1.msra.mxu0 0.0
    %256 = vmatprep.subr.mxu0 0.0
    %257 = vmatpush1.msra.mxu0 0.0
    %258 = vmatprep.subr.mxu0 0.0
    %259 = vmatpush1.msra.mxu0 0.0
    %260 = vmatprep.subr.mxu0 0.0
    %261 = vmatpush1.msra.mxu0 0.0
    %262 = vmatprep.subr.mxu0 0.0
    %263 = vmatpush1.msra.mxu0 0.0
    %264 = vmatprep.subr.mxu0 0.0
    %265 = vmatpush1.msra.mxu0 0.0
    %266 = vmatprep.subr.mxu0 0.0
    %267 = vmatpush1.msra.mxu0 0.0
    %268 = vmatprep.subr.mxu0 0.0
    %269 = vmatpush1.msra.mxu0 0.0
    %270 = vmatprep.subr.mxu0 0.0
    %271 = vmatpush1.msra.mxu0 0.0
    %272 = vmatprep.subr.mxu0 0.0
    %273 = vmatpush1.msra.mxu0 0.0
    %274 = vmatprep.subr.mxu0 0.0
    %275 = vmatpush1.msra.mxu0 0.0
    %276 = vmatprep.subr.mxu0 0.0
    %277 = vmatpush1.msra.mxu0 0.0
    %278 = vmatprep.subr.mxu0 0.0
    %279 = vmatpush1.msra.mxu0 0.0
    %280 = vmatprep.subr.mxu0 0.0
    %281 = vmatpush1.msra.mxu0 0.0
    %282 = vmatprep.subr.mxu0 0.0
    %283 = vmatpush1.msra.mxu0 0.0
    %284 = vmatprep.subr.mxu0 0.0
    %285 = vmatpush1.msra.mxu0 0.0
    %286 = vmatprep.subr.mxu0 0.0
    %287 = vmatpush1.msra.mxu0 0.0
    %288 = vmatprep.subr.mxu0 0.0
    %289 = vmatpush1.msra.mxu0 0.0
    %290 = vmatprep.subr.mxu0 0.0
    %291 = vmatpush1.msra.mxu0 0.0
    %292 = vmatprep.subr.mxu0 0.0
    %293 = vmatpush1.msra.mxu0 0.0
    %294 = vmatprep.subr.mxu0 0.0
    %295 = vmatpush1.msra.mxu0 0.0
    %296 = vmatprep.subr.mxu0 0.0
    %297 = vmatpush1.msra.mxu0 0.0
    %298 = vmatprep.subr.mxu0 0.0
    %299 = vmatpush1.msra.mxu0 0.0
    %300 = vmatprep.subr.mxu0 0.0
    %301 = vmatpush1.msra.mxu0 0.0
    %302 = vmatprep.subr.mxu0 0.0
    %303 = vmatpush1.msra.mxu0 0.0
    %304 = vmatprep.subr.mxu0 0.0
    %305 = vmatpush1.msra.mxu0 0.0
    %306 = vmatprep.subr.mxu0 0.0
    %307 = vmatpush1.msra.mxu0 0.0
    %308 = vmatprep.subr.mxu0 0.0
    %309 = vmatpush1.msra.mxu0 0.0
    %310 = vmatprep.mubr.f32.mxu0 0.0
    %311 = vmatmul.mubr.f32.gmra.mrb[0].mxu0 %v231
    %v312 = vpop.f32.mrb[0].mxu0
    %v313 = vadd.f32 %v227, %v312
    %v314 = vpop.f32.mrb[0].mxu0
    %v315 = vadd.f32 %v227, %v314
    %316 = vdwg.mxu0
    %317 = vmatprep.subr.mxu0 %v244
    %318 = vmatpush1.msra.mxu0 %v241
    %319 = vmatprep.subr.mxu0 0.0
    %320 = vmatpush1.msra.mxu0 0.0
    %321 = vmatprep.subr.mxu0 0.0
    %322 = vmatpush1.msra.mxu0 0.0
    %323 = vmatprep.subr.mxu0 0.0
    %324 = vmatpush1.msra.mxu0 0.0
    %325 = vmatprep.subr.mxu0 0.0
    %326 = vmatpush1.msra.mxu0 0.0
    %327 = vmatprep.subr.mxu0 0.0
    %328 = vmatpush1.msra.mxu0 0.0
    %329 = vmatprep.subr.mxu0 0.0
    %330 = vmatpush1.msra.mxu0 0.0
    %331 = vmatprep.subr.mxu0 0.0
    %332 = vmatpush1.msra.mxu0 0.0
    %333 = vmatprep.subr.mxu0 0.0
    %334 = vmatpush1.msra.mxu0 0.0
    %335 = vmatprep.subr.mxu0 0.0
    %336 = vmatpush1.msra.mxu0 0.0
    %337 = vmatprep.subr.mxu0 0.0
    %338 = vmatpush1.msra.mxu0 0.0
    %339 = vmatprep.subr.mxu0 0.0
    %340 = vmatpush1.msra.mxu0 0.0
    %341 = vmatprep.subr.mxu0 0.0
    %342 = vmatpush1.msra.mxu0 0.0
    %343 = vmatprep.subr.mxu0 0.0
    %344 = vmatpush1.msra.mxu0 0.0
    %345 = vmatprep.subr.mxu0 0.0
    %346 = vmatpush1.msra.mxu0 0.0
    %347 = vmatprep.subr.mxu0 0.0
    %348 = vmatpush1.msra.mxu0 0.0
    %349 = vmatprep.subr.mxu0 0.0
    %350 = vmatpush1.msra.mxu0 0.0
    %351 = vmatprep.subr.mxu0 0.0
    %352 = vmatpush1.msra.mxu0 0.0
    %353 = vmatprep.subr.mxu0 0.0
    %354 = vmatpush1.msra.mxu0 0.0
    %355 = vmatprep.subr.mxu0 0.0
    %356 = vmatpush1.msra.mxu0 0.0
    %357 = vmatprep.subr.mxu0 0.0
    %358 = vmatpush1.msra.mxu0 0.0
    %359 = vmatprep.subr.mxu0 0.0
    %360 = vmatpush1.msra.mxu0 0.0
    %361 = vmatprep.subr.mxu0 0.0
    %362 = vmatpush1.msra.mxu0 0.0
    %363 = vmatprep.subr.mxu0 0.0
    %364 = vmatpush1.msra.mxu0 0.0
    %365 = vmatprep.subr.mxu0 0.0
    %366 = vmatpush1.msra.mxu0 0.0
    %367 = vmatprep.subr.mxu0 0.0
    %368 = vmatpush1.msra.mxu0 0.0
    %369 = vmatprep.subr.mxu0 0.0
    %370 = vmatpush1.msra.mxu0 0.0
    %371 = vmatprep.subr.mxu0 0.0
    %372 = vmatpush1.msra.mxu0 0.0
    %373 = vmatprep.subr.mxu0 0.0
    %374 = vmatpush1.msra.mxu0 0.0
    %375 = vmatprep.subr.mxu0 0.0
    %376 = vmatpush1.msra.mxu0 0.0
    %377 = vmatprep.subr.mxu0 0.0
    %378 = vmatpush1.msra.mxu0 0.0
    %379 = vmatprep.subr.mxu0 0.0
    %380 = vmatpush1.msra.mxu0 0.0
    %381 = vmatprep.mubr.f32.mxu0 0.0
    %382 = vmatmul.mubr.f32.gmra.mrb[0].mxu0 %v231
    %v383 = vpop.f32.mrb[0].mxu0
    %v384 = vadd.f32 %v227, %v383
    %v385 = vpop.f32.mrb[0].mxu0
    %v386 = vadd.f32 %v227, %v385
    %387 = vdwg.mxu0
    %v388 = vxor.u32 %v313, 2147483648
    %v389 = vxor.u32 %v315, 2147483648
    %v390 = vxor.u32 %v384, 2147483648
    %v391 = vxor.u32 %v386, 2147483648
    %v392 = vmul.f32 %v388, 1.442695
    %v393 = vpow.pop %v392
    %v394 = vmul.f32 %v389, 1.442695
    %v395 = vpow.pop %v394
    %v396 = vmul.f32 %v390, 1.442695
    %v397 = vpow.pop %v396
    %v398 = vmul.f32 %v391, 1.442695
    %v399 = vpow.pop %v398
    %v400 = vadd.f32 %v393, 1.0
    %v401 = vadd.f32 %v395, 1.0
    %v402 = vadd.f32 %v397, 1.0
    %v403 = vadd.f32 %v399, 1.0
    %v404 = vrcp.pop %v400
    %v405 = vmul.f32 1.0, %v404
    %v406 = vrcp.pop %v401
    %v407 = vmul.f32 1.0, %v406
    %v408 = vrcp.pop %v402
    %v409 = vmul.f32 1.0, %v408
    %v410 = vrcp.pop %v403
    %v411 = vmul.f32 1.0, %v410
    %v412 = vld [vmem:[%s5] sm:$0x1]
    %v413 = vld [vmem:[#allocation2] sm:$0x1]
    %415 = vset.pattern.permute.xlu0 0
    %416 = vperm.xlu0 %415, %v413
    %v417 = vpop.permute.xlu0 %416
    %v419 = vlaneseq
    %v420 = vshrl.u32 %v419, 7
    %v421 = vsub.s32 0, %v420
    %v422 = vrot.slane %v417, %v421
    %vm423 = vcmask 31744
    %v425 = vsel %vm423, %v412, 0
    %vm427 = vcmask 1043456
    %v429 = vsel %vm427, %v405, 0
    %v432 = vsel %vm427, %v407, 0
    %v435 = vsel %vm427, %v409, 0
    %v438 = vsel %vm427, %v411, 0
    %440 = vmatprep.subr.mxu0 %v432
    %441 = vmatpush1.msra.mxu0 %v429
    %442 = vmatprep.subr.mxu0 0.0
    %443 = vmatpush1.msra.mxu0 0.0
    %444 = vmatprep.subr.mxu0 0.0
    %445 = vmatpush1.msra.mxu0 0.0
    %446 = vmatprep.subr.mxu0 0.0
    %447 = vmatpush1.msra.mxu0 0.0
    %448 = vmatprep.subr.mxu0 0.0
    %449 = vmatpush1.msra.mxu0 0.0
    %450 = vmatprep.subr.mxu0 0.0
    %451 = vmatpush1.msra.mxu0 0.0
    %452 = vmatprep.subr.mxu0 0.0
    %453 = vmatpush1.msra.mxu0 0.0
    %454 = vmatprep.subr.mxu0 0.0
    %455 = vmatpush1.msra.mxu0 0.0
    %456 = vmatprep.subr.mxu0 0.0
    %457 = vmatpush1.msra.mxu0 0.0
    %458 = vmatprep.subr.mxu0 0.0
    %459 = vmatpush1.msra.mxu0 0.0
    %460 = vmatprep.subr.mxu0 0.0
    %461 = vmatpush1.msra.mxu0 0.0
    %462 = vmatprep.subr.mxu0 0.0
    %463 = vmatpush1.msra.mxu0 0.0
    %464 = vmatprep.subr.mxu0 0.0
    %465 = vmatpush1.msra.mxu0 0.0
    %466 = vmatprep.subr.mxu0 0.0
    %467 = vmatpush1.msra.mxu0 0.0
    %468 = vmatprep.subr.mxu0 0.0
    %469 = vmatpush1.msra.mxu0 0.0
    %470 = vmatprep.subr.mxu0 0.0
    %471 = vmatpush1.msra.mxu0 0.0
    %472 = vmatprep.subr.mxu0 0.0
    %473 = vmatpush1.msra.mxu0 0.0
    %474 = vmatprep.subr.mxu0 0.0
    %475 = vmatpush1.msra.mxu0 0.0
    %476 = vmatprep.subr.mxu0 0.0
    %477 = vmatpush1.msra.mxu0 0.0
    %478 = vmatprep.subr.mxu0 0.0
    %479 = vmatpush1.msra.mxu0 0.0
    %480 = vmatprep.subr.mxu0 0.0
    %481 = vmatpush1.msra.mxu0 0.0
    %482 = vmatprep.subr.mxu0 0.0
    %483 = vmatpush1.msra.mxu0 0.0
    %484 = vmatprep.subr.mxu0 0.0
    %485 = vmatpush1.msra.mxu0 0.0
    %486 = vmatprep.subr.mxu0 0.0
    %487 = vmatpush1.msra.mxu0 0.0
    %488 = vmatprep.subr.mxu0 0.0
    %489 = vmatpush1.msra.mxu0 0.0
    %490 = vmatprep.subr.mxu0 0.0
    %491 = vmatpush1.msra.mxu0 0.0
    %492 = vmatprep.subr.mxu0 0.0
    %493 = vmatpush1.msra.mxu0 0.0
    %494 = vmatprep.subr.mxu0 0.0
    %495 = vmatpush1.msra.mxu0 0.0
    %496 = vmatprep.subr.mxu0 0.0
    %497 = vmatpush1.msra.mxu0 0.0
    %498 = vmatprep.subr.mxu0 0.0
    %499 = vmatpush1.msra.mxu0 0.0
    %500 = vmatprep.subr.mxu0 0.0
    %501 = vmatpush1.msra.mxu0 0.0
    %502 = vmatprep.subr.mxu0 0.0
    %503 = vmatpush1.msra.mxu0 0.0
    %504 = vmatprep.mubr.f32.mxu0 0.0
    %505 = vmatmul.mubr.f32.gmra.mrb[0].mxu0 %v425
    %v506 = vpop.f32.mrb[0].mxu0
    %v507 = vadd.f32 %v422, %v506
    %v508 = vpop.f32.mrb[0].mxu0
    %v509 = vadd.f32 %v422, %v508
    %510 = vdwg.mxu0
    %511 = vmatprep.subr.mxu0 %v438
    %512 = vmatpush1.msra.mxu0 %v435
    %513 = vmatprep.subr.mxu0 0.0
    %514 = vmatpush1.msra.mxu0 0.0
    %515 = vmatprep.subr.mxu0 0.0
    %516 = vmatpush1.msra.mxu0 0.0
    %517 = vmatprep.subr.mxu0 0.0
    %518 = vmatpush1.msra.mxu0 0.0
    %519 = vmatprep.subr.mxu0 0.0
    %520 = vmatpush1.msra.mxu0 0.0
    %521 = vmatprep.subr.mxu0 0.0
    %522 = vmatpush1.msra.mxu0 0.0
    %523 = vmatprep.subr.mxu0 0.0
    %524 = vmatpush1.msra.mxu0 0.0
    %525 = vmatprep.subr.mxu0 0.0
    %526 = vmatpush1.msra.mxu0 0.0
    %527 = vmatprep.subr.mxu0 0.0
    %528 = vmatpush1.msra.mxu0 0.0
    %529 = vmatprep.subr.mxu0 0.0
    %530 = vmatpush1.msra.mxu0 0.0
    %531 = vmatprep.subr.mxu0 0.0
    %532 = vmatpush1.msra.mxu0 0.0
    %533 = vmatprep.subr.mxu0 0.0
    %534 = vmatpush1.msra.mxu0 0.0
    %535 = vmatprep.subr.mxu0 0.0
    %536 = vmatpush1.msra.mxu0 0.0
    %537 = vmatprep.subr.mxu0 0.0
    %538 = vmatpush1.msra.mxu0 0.0
    %539 = vmatprep.subr.mxu0 0.0
    %540 = vmatpush1.msra.mxu0 0.0
    %541 = vmatprep.subr.mxu0 0.0
    %542 = vmatpush1.msra.mxu0 0.0
    %543 = vmatprep.subr.mxu0 0.0
    %544 = vmatpush1.msra.mxu0 0.0
    %545 = vmatprep.subr.mxu0 0.0
    %546 = vmatpush1.msra.mxu0 0.0
    %547 = vmatprep.subr.mxu0 0.0
    %548 = vmatpush1.msra.mxu0 0.0
    %549 = vmatprep.subr.mxu0 0.0
    %550 = vmatpush1.msra.mxu0 0.0
    %551 = vmatprep.subr.mxu0 0.0
    %552 = vmatpush1.msra.mxu0 0.0
    %553 = vmatprep.subr.mxu0 0.0
    %554 = vmatpush1.msra.mxu0 0.0
    %555 = vmatprep.subr.mxu0 0.0
    %556 = vmatpush1.msra.mxu0 0.0
    %557 = vmatprep.subr.mxu0 0.0
    %558 = vmatpush1.msra.mxu0 0.0
    %559 = vmatprep.subr.mxu0 0.0
    %560 = vmatpush1.msra.mxu0 0.0
    %561 = vmatprep.subr.mxu0 0.0
    %562 = vmatpush1.msra.mxu0 0.0
    %563 = vmatprep.subr.mxu0 0.0
    %564 = vmatpush1.msra.mxu0 0.0
    %565 = vmatprep.subr.mxu0 0.0
    %566 = vmatpush1.msra.mxu0 0.0
    %567 = vmatprep.subr.mxu0 0.0
    %568 = vmatpush1.msra.mxu0 0.0
    %569 = vmatprep.subr.mxu0 0.0
    %570 = vmatpush1.msra.mxu0 0.0
    %571 = vmatprep.subr.mxu0 0.0
    %572 = vmatpush1.msra.mxu0 0.0
    %573 = vmatprep.subr.mxu0 0.0
    %574 = vmatpush1.msra.mxu0 0.0
    %575 = vmatprep.mubr.f32.mxu0 0.0
    %576 = vmatmul.mubr.f32.gmra.mrb[0].mxu0 %v425
    %v577 = vpop.f32.mrb[0].mxu0
    %v578 = vadd.f32 %v422, %v577
    %v579 = vpop.f32.mrb[0].mxu0
    %v580 = vadd.f32 %v422, %v579
    %581 = vdwg.mxu0
    %v582 = vxor.u32 %v507, 2147483648
    %v583 = vxor.u32 %v509, 2147483648
    %v584 = vxor.u32 %v578, 2147483648
    %v585 = vxor.u32 %v580, 2147483648
    %v586 = vmul.f32 %v582, 1.442695
    %v587 = vpow.pop %v586
    %v588 = vmul.f32 %v583, 1.442695
    %v589 = vpow.pop %v588
    %v590 = vmul.f32 %v584, 1.442695
    %v591 = vpow.pop %v590
    %v592 = vmul.f32 %v585, 1.442695
    %v593 = vpow.pop %v592
    %v594 = vadd.f32 %v587, 1.0
    %v595 = vadd.f32 %v589, 1.0
    %v596 = vadd.f32 %v591, 1.0
    %v597 = vadd.f32 %v593, 1.0
    %v598 = vrcp.pop %v594
    %v599 = vmul.f32 1.0, %v598
    %v600 = vrcp.pop %v595
    %v601 = vmul.f32 1.0, %v600
    %v602 = vrcp.pop %v596
    %v603 = vmul.f32 1.0, %v602
    %v604 = vrcp.pop %v597
    %v605 = vmul.f32 1.0, %v604
    %v610 = vcombine.low %v599, %v601
    %v611 = vcombine.low %v603, %v605
    %v613 = vunpack.c.l.s4 1966171168
    %v614 = vunpack.c.0.s8 %v613
    %v615 = vlaneseq
    %v616 = vshrl.u32 %v615, 7
    %v617 = vsub.s32 %v614, %v616
    %v618 = vrot.slane %v610, %v617
    %v620 = vunpack.c.l.s4 1966171168
    %v621 = vunpack.c.0.s8 %v620
    %v622 = vlaneseq
    %v623 = vshrl.u32 %v622, 7
    %v624 = vsub.s32 %v621, %v623
    %v625 = vrot.slane %v611, %v624
    %v626 = vcombine.low %v618, %v625
    %v628 = vunpack.c.l.s4 1966171168
    %v629 = vunpack.c.0.s8 %v628
    %v630 = vlaneseq
    %v631 = vshrl.u32 %v630, 7
    %v632 = vsub.s32 %v629, %v631
    %v633 = vrot.slane %v626, %v632
    %v635 = vlaneseq
    %vm636 = vcmp.ge.s32.totalorder %v635, 0
    %vm637 = vcmp.lt.s32.totalorder %v635, 512
    %vm638 = vmand %vm636, %vm637
    %639 = vst.msk [vmem:[#allocation6] sm:$0xf] %vm638, %v633
    // Predicated region
    $region34: #{tpu_custom_call.1} parent=1 // pred_check
      _
    $region35: #{tpu_custom_call.1} parent=1 // pred_check_branch
      %641 = sbr.rel (0) target = $region37
    $region36: #{tpu_custom_call.1} parent=1 // pred_region
      %s643 = ssub.s32 64, 64
      %644 = vsyncadd [#allocation5], %s643
      %s646 = sshll.u32 [#allocation6], 4
      %s647 = int_to_ptr.vmem [resolvable:$true] %s646
      %649 = dma.vmem_to_hbm [thread:$0]  %s647, 64, %s7, [#allocation5]
    $region37: #{tpu_custom_call.1} parent=1 // pred_fallthru
      _
    // Predicated region
    $region38: #{tpu_custom_call.1} parent=1 // pred_check
      _
    $region39: #{tpu_custom_call.1} parent=1 // pred_check_branch
      %651 = sbr.rel (0) target = $region41
    $region40: #{tpu_custom_call.1} parent=1 // pred_region
      %652 = dma.done [#allocation5], 64
    $region41: #{tpu_custom_call.1} parent=1 // pred_fallthru
      _
    %653 = vsyncpa [#allocation4], 1
    %654 = vsyncpa [#allocation5], 1

</llo_original>
